<compile_context>
chip_gen: v5e
topology: v5e:2x2
jax: 0.10.0
libtpu: 0.0.40
codegen_flags: <defaults>
</compile_context>

<pallas_src>
import jax
import jax.numpy as jnp
from jax.experimental import pallas as pl
from jax.experimental.pallas import tpu as pltpu

NEG_SLOPE = 0.01          # F.leaky_relu default negative_slope
MASK_BIAS = -1e9          # finite "minus infinity" for masked (non-)edges


def _round_up(x, m):
    return (x + m - 1) // m * m


def _pick_tile(total, cap):
    """Largest multiple-of-128 divisor of `total` that does not exceed cap."""
    best = 128
    t = 128
    lim = min(total, cap)
    while t <= lim:
        if total % t == 0:
            best = t
        t += 128
    return best


# ---------------------------------------------------------------------------
# Kernel 1: fused node projection + attention scores
#   one MXU dot against [W^T | W^T a_src | W^T a_dst]  ->  [z | s_src | s_dst]
# ---------------------------------------------------------------------------
def gat_proj_kernel(h_ref, w_ref, z_ref, s_ref):
    res = jnp.dot(h_ref[...], w_ref[...], preferred_element_type=jnp.float32)
    d_pad = z_ref.shape[-1]
    z_ref[...] = res[:, :d_pad].astype(jnp.bfloat16)   # projected features
    s_ref[...] = res[:, d_pad:]                        # cols 0/1 = s_src/s_dst


# ---------------------------------------------------------------------------
# Kernel 2: flash-style masked-softmax aggregation over src tiles
#   grid = (dst_row_tiles, src_col_tiles); src axis is the reduction axis.
# ---------------------------------------------------------------------------
def gat_attn_kernel(s_dst_ref, s_src_ref, mask_ref, z_ref, out_ref,
                    m_ref, l_ref, acc_ref):
    j = pl.program_id(1)

    @pl.when(j == 0)
    def _():
        m_ref[...] = jnp.full_like(m_ref, -1e30)
        l_ref[...] = jnp.zeros_like(l_ref)
        acc_ref[...] = jnp.zeros_like(acc_ref)

    # e[i, j] = leaky_relu(s_dst[i] + s_src[j]), masked where there is no edge
    # (pure VPU: broadcast add + two selects; mask is a 1-byte/edge stream)
    e = s_dst_ref[...] + s_src_ref[...]                       # [TI, TJ] f32
    e = jnp.where(e > 0, e, NEG_SLOPE * e)                    # leaky_relu
    e = jnp.where(mask_ref[...] != 0, e, MASK_BIAS)           # mask AFTER leaky

    # online softmax update (statistics kept in f32)
    m_prev = m_ref[...]
    m_new = jnp.maximum(m_prev, jnp.max(e, axis=1, keepdims=True))
    corr = jnp.exp(m_prev - m_new)
    p = jnp.exp(e - m_new)                                    # [TI, TJ] f32
    l_ref[...] = corr * l_ref[...] + jnp.sum(p, axis=1, keepdims=True)
    acc_ref[...] = corr * acc_ref[...] + jnp.dot(
        p.astype(jnp.bfloat16), z_ref[...], preferred_element_type=jnp.float32)
    m_ref[...] = m_new

    @pl.when(j == pl.num_programs(1) - 1)
    def _():
        # clamp guards nodes with zero in-edges / padded rows (no inf/NaN);
        # exact divide (runs once per output tile, so it is free)
        denom = jnp.maximum(l_ref[...], 1e-20)
        out_ref[...] = (acc_ref[...] / denom).astype(out_ref.dtype)


# ---------------------------------------------------------------------------
# Wrapper: pad to lane-dense / tile-aligned shapes and run the two kernels.
# ---------------------------------------------------------------------------
def gat_layer(h, w, a, adj, *, tile_i_cap=512, tile_j_cap=2048,
              proj_tile_cap=1024):
    """GAT forward.

    h   : [N, in_dim]  node features (f32)
    w   : [out_dim, in_dim]      fc.weight      (nn.Linear, bias=False)
    a   : [1, 2*out_dim]         attn_fc.weight (nn.Linear, bias=False)
    adj : [N, N] with adj[i, j] = 1 iff there is an edge  j -> i
    """
    n, in_dim = h.shape
    out_dim = w.shape[0]

    in_pad = _round_up(max(in_dim, 128), 128)
    d_pad = _round_up(max(out_dim, 128), 128)

    # Pad the node count: big graphs round to 512 so 512-class tiles always
    # divide it (and the "parallel" row axis has >= 2 tiles for v7x's two
    # TensorCores); small graphs only round to 128.
    n_pad = _round_up(n, 512) if n >= 1024 else _round_up(n, 128)
    tile_i = _pick_tile(n_pad, tile_i_cap)
    tile_j = _pick_tile(n_pad, tile_j_cap)
    tile_p = _pick_tile(n_pad, proj_tile_cap)

    # ---- lane-dense, bf16 operands ---------------------------------------
    h_p = jnp.pad(h.astype(jnp.bfloat16),
                  ((0, n_pad - n), (0, in_pad - in_dim)))

    # fused weight: [ W^T | W^T a_src | W^T a_dst | 0 ... ]  ->  one MXU dot
    wt = jnp.transpose(w).astype(jnp.float32)                 # [in_dim, out_dim]
    a_src = a[0, :out_dim].astype(jnp.float32)
    a_dst = a[0, out_dim:].astype(jnp.float32)
    wa = jnp.stack([wt @ a_src, wt @ a_dst], axis=1)          # [in_dim, 2]
    w_aug = jnp.zeros((in_pad, d_pad + 128), jnp.bfloat16)
    w_aug = w_aug.at[:in_dim, :out_dim].set(wt.astype(jnp.bfloat16))
    w_aug = w_aug.at[:in_dim, d_pad:d_pad + 2].set(wa.astype(jnp.bfloat16))

    # adjacency mask: int8, built with a single pad in its final dtype
    # (1 B/edge of HBM traffic in kernel 2; padded rows/cols are masked out)
    mask = jnp.pad((adj > 0).astype(jnp.int8),
                   ((0, n_pad - n), (0, n_pad - n)))

    # ---- kernel 1: fused projection + scores ------------------------------
    z_p, s_all = pl.pallas_call(
        gat_proj_kernel,
        out_shape=(jax.ShapeDtypeStruct((n_pad, d_pad), jnp.bfloat16),
                   jax.ShapeDtypeStruct((n_pad, 128), jnp.float32)),
        grid=(n_pad // tile_p,),
        in_specs=[
            pl.BlockSpec((tile_p, in_pad), lambda i: (i, 0)),
            pl.BlockSpec((in_pad, d_pad + 128), lambda i: (0, 0)),
        ],
        out_specs=(
            pl.BlockSpec((tile_p, d_pad), lambda i: (i, 0)),
            pl.BlockSpec((tile_p, 128), lambda i: (i, 0)),
        ),
        compiler_params=pltpu.CompilerParams(
            dimension_semantics=("parallel",)),
    )(h_p, w_aug)

    # src scores as a [1, N] row (one cheap reshape outside the inner loop,
    # so the attention kernel never transposes); dst scores as a [N, 1] column
    s_src_row = s_all[:, 0].reshape(1, n_pad)
    s_dst_col = s_all[:, 1:2]

    # explicit VMEM limit: double-buffered working set + headroom, capped so
    # it stays inside v7x's 64 MiB physical VMEM
    ws = (2 * tile_i * tile_j * 1            # int8 mask tile
          + 2 * tile_j * d_pad * 2           # bf16 z (src) tile
          + 2 * tile_i * d_pad * 2           # bf16 output tile
          + 2 * (tile_i + tile_j) * 4        # score row / column
          + tile_i * d_pad * 4               # f32 accumulator scratch
          + tile_i * 8)                      # m / l scratch
    vmem_limit = int(min(48 * 2**20, max(32 * 2**20, 3 * ws)))

    # ---- kernel 2: tiled flash-softmax aggregation -------------------------
    out_p = pl.pallas_call(
        gat_attn_kernel,
        out_shape=jax.ShapeDtypeStruct((n_pad, d_pad), jnp.bfloat16),
        grid=(n_pad // tile_i, n_pad // tile_j),
        in_specs=[
            pl.BlockSpec((tile_i, 1), lambda i, j: (i, 0)),        # s_dst column
            pl.BlockSpec((1, tile_j), lambda i, j: (0, j)),        # s_src row
            pl.BlockSpec((tile_i, tile_j), lambda i, j: (i, j)),   # int8 mask tile
            pl.BlockSpec((tile_j, d_pad), lambda i, j: (j, 0)),    # z (src) tile
        ],
        out_specs=pl.BlockSpec((tile_i, d_pad), lambda i, j: (i, 0)),
        scratch_shapes=[
            pltpu.VMEM((tile_i, 1), jnp.float32),        # running max m
            pltpu.VMEM((tile_i, 1), jnp.float32),        # running sum l
            pltpu.VMEM((tile_i, d_pad), jnp.float32),    # output accumulator
        ],
        compiler_params=pltpu.CompilerParams(
            dimension_semantics=("parallel", "arbitrary"),
            vmem_limit_bytes=vmem_limit),
    )(s_dst_col, s_src_row, mask, z_p)

    return out_p[:n, :out_dim].astype(jnp.float32)


if __name__ == "__main__":
    # small, deterministic problem (non-multiple of the tile size on purpose,
    # to exercise the padded-row / masked-column path)
    N_NODES = 200
    IN_DIM = 32
    OUT_DIM = 16

    key = jax.random.PRNGKey(0)
    k_h, k_w, k_a = jax.random.split(key, 3)

    # node features
    h = jax.random.normal(k_h, (N_NODES, IN_DIM), dtype=jnp.float32)

    # fc: nn.Linear(in_dim, out_dim, bias=False) -> weight [out_dim, in_dim]
    w = jax.random.normal(k_w, (OUT_DIM, IN_DIM), dtype=jnp.float32) * 0.1

    # attn_fc: nn.Linear(2*out_dim, 1, bias=False) -> weight [1, 2*out_dim]
    a = jax.random.normal(k_a, (1, 2 * OUT_DIM), dtype=jnp.float32) * 0.1

    # graph: directed ring + self-loops; adj[i, j] = 1 iff edge j -> i
    idx = jnp.arange(N_NODES)
    adj = jnp.zeros((N_NODES, N_NODES), dtype=jnp.float32)
    adj = adj.at[idx, idx].set(1.0)                          # self-loops
    adj = adj.at[idx, (idx - 1) % N_NODES].set(1.0)          # ring edges (i-1) -> i

    out = gat_layer(h, w, a, adj)
    jax.block_until_ready(out)

    # pure-JAX f32 reference (dense masked-softmax formulation)
    z_ref = h @ w.T
    a_src = a[:, :OUT_DIM]
    a_dst = a[:, OUT_DIM:]
    e_ref = (z_ref @ a_dst.T) + (z_ref @ a_src.T).T
    e_ref = jnp.where(e_ref > 0, e_ref, NEG_SLOPE * e_ref)
    e_ref = jnp.where(adj > 0, e_ref, MASK_BIAS)
    p_ref = jnp.exp(e_ref - e_ref.max(axis=1, keepdims=True))
    p_ref = jnp.where(adj > 0, p_ref, 0.0)
    alpha_ref = p_ref / p_ref.sum(axis=1, keepdims=True)
    out_ref = alpha_ref @ z_ref

    # kernel uses bf16 MXU inputs / bf16 output -> looser tolerance vs f32 ref
    assert out.shape == out_ref.shape
    assert jnp.allclose(out, out_ref, atol=3e-2, rtol=3e-2), (
        float(jnp.max(jnp.abs(out - out_ref))))

    print("KERNEL_OK")
</pallas_src>

<mosaic_0001>
module attributes {stable_mosaic.version = 11 : i64} {
  func.func @gat_proj_kernel(%arg0: i32, %arg1: memref<256x128xbf16, #tpu.memory_space<vmem>>, %arg2: memref<128x256xbf16, #tpu.memory_space<vmem>>, %arg3: memref<256x128xbf16, #tpu.memory_space<vmem>>, %arg4: memref<256x128xf32, #tpu.memory_space<vmem>>) attributes {dimension_semantics = [#tpu.dimension_semantics<parallel>], iteration_bounds = array<i64: 1>, scalar_prefetch = 0 : i64, scratch_operands = 0 : i64, tpu.core_type = #tpu.core_type<tc>, window_params = [{transform_indices = @transform_0, window_bounds = array<i64: 256, 128>}, {pipeline_mode = #tpu.pipeline_mode<synchronous>, transform_indices = @transform_1, window_bounds = array<i64: 128, 256>}, {transform_indices = @transform_2, window_bounds = array<i64: 256, 128>}, {transform_indices = @transform_3, window_bounds = array<i64: 256, 128>}]} {
    %c0 = arith.constant 0 : index
    %c0_0 = arith.constant 0 : index
    %0 = vector.load %arg1[%c0, %c0_0] : memref<256x128xbf16, #tpu.memory_space<vmem>>, vector<256x128xbf16>
    %c0_1 = arith.constant 0 : index
    %c0_2 = arith.constant 0 : index
    %1 = vector.load %arg2[%c0_1, %c0_2] : memref<128x256xbf16, #tpu.memory_space<vmem>>, vector<128x256xbf16>
    %cst = arith.constant dense<0.000000e+00> : vector<256x256xf32>
    %2 = tpu.matmul %0, %1, %cst {dimension_numbers = #tpu.dot_dimension_numbers<[1], [0], [0], [1], [0, 0, 1, 1], [], []>} : vector<256x128xbf16>, vector<128x256xbf16>, vector<256x256xf32> -> vector<256x256xf32>
    %3 = vector.extract_strided_slice %2 {offsets = [0, 0], sizes = [256, 128], strides = [1, 1]} : vector<256x256xf32> to vector<256x128xf32>
    %4 = arith.truncf %3 : vector<256x128xf32> to vector<256x128xbf16>
    %c0_3 = arith.constant 0 : index
    %c0_4 = arith.constant 0 : index
    %5 = vector.load %arg3[%c0_3, %c0_4] : memref<256x128xbf16, #tpu.memory_space<vmem>>, vector<256x128xbf16>
    tpu.vector_store %arg3[%c0_3, %c0_4], %4 {strides = array<i32>} : memref<256x128xbf16, #tpu.memory_space<vmem>>, vector<256x128xbf16>,
    %6 = vector.extract_strided_slice %2 {offsets = [0, 128], sizes = [256, 128], strides = [1, 1]} : vector<256x256xf32> to vector<256x128xf32>
    %c0_5 = arith.constant 0 : index
    %c0_6 = arith.constant 0 : index
    %7 = vector.load %arg4[%c0_5, %c0_6] : memref<256x128xf32, #tpu.memory_space<vmem>>, vector<256x128xf32>
    tpu.vector_store %arg4[%c0_5, %c0_6], %6 {strides = array<i32>} : memref<256x128xf32, #tpu.memory_space<vmem>>, vector<256x128xf32>,
    return
  }
  func.func @transform_0(%arg0: i32) -> (i32, i32) {
    %c0_i32 = arith.constant 0 : i32
    %c0_i32_0 = arith.constant 0 : i32
    return %arg0, %c0_i32 : i32, i32
  }
  func.func @transform_1(%arg0: i32) -> (i32, i32) {
    %c0_i32 = arith.constant 0 : i32
    %c0_i32_0 = arith.constant 0 : i32
    %c0_i32_1 = arith.constant 0 : i32
    return %c0_i32, %c0_i32_0 : i32, i32
  }
  func.func @transform_2(%arg0: i32) -> (i32, i32) {
    %c0_i32 = arith.constant 0 : i32
    %c0_i32_0 = arith.constant 0 : i32
    return %arg0, %c0_i32 : i32, i32
  }
  func.func @transform_3(%arg0: i32) -> (i32, i32) {
    %c0_i32 = arith.constant 0 : i32
    %c0_i32_0 = arith.constant 0 : i32
    return %arg0, %c0_i32 : i32, i32
  }
}

</mosaic_0001>

<llo_original>
// kernel: tpu_custom_call.1
$region0: #{tpu_custom_call.1}
  #allocation0 [shape = 'u32[]', space=smem, size = 0x4, offset = 0x4, fixed_abs, tag = 'smem constant byte address 0x4 - core index']
  #allocation1 [shape = 'u32[72,128]{1,0:T(1,128)}', space=vmem, size = 0x9000, scoped, tag = 'internal scratch']
  %s0 = inlined_call_operand.hbm [shape: bf16[256,128], index: 0, kind: input, shape index: {}]
  %s1 = inlined_call_operand.hbm [shape: bf16[128,256], index: 1, kind: input, shape index: {}]
  %s2 = inlined_call_operand.hbm [shape: bf16[256,128], index: 2, kind: output, shape index: {0}]
  %s3 = inlined_call_operand.hbm [shape: f32[256,128], index: 3, kind: output, shape index: {1}]
  %4 = xla_tuple %s2, %s3
  %s5 = sld [smem:[#allocation0]]
  $region34: #{tpu_custom_call.1} parent=0
    _
  %s7 = ssub.s32 1, %s5
  %s8 = scalar_select 0, %s7, %s5
  $region1: #{tpu_custom_call.1} parent=0
    #allocation2 [shape = 'u8[65536]{0}', space=vmem, size = 0x10000, scoped, tag = 'input window, operand 0, single buffered']
    #allocation3 [shape = 's32[1]{0}', space=sflag, size = 0x4, scoped, tag = 'scoped memory for tpu_custom_call.1']
    #allocation4 [shape = 's32[1]{0}', space=sflag, size = 0x4, scoped, tag = 'scoped memory for tpu_custom_call.1']
    #allocation5 [shape = 'u8[65536]{0}', space=vmem, size = 0x10000, scoped, tag = 'input window, operand 1, single buffered']
    #allocation6 [shape = 's32[1]{0}', space=sflag, size = 0x4, scoped, tag = 'scoped memory for tpu_custom_call.1']
    #allocation7 [shape = 'u8[65536]{0}', space=vmem, size = 0x10000, scoped, tag = 'output window, operand 0, single buffered']
    #allocation8 [shape = 'u8[131072]{0}', space=vmem, size = 0x20000, scoped, tag = 'output window, operand 1, single buffered']
    #allocation9 [shape = 's32[1]{0}', space=sflag, size = 0x4, scoped, tag = 'scoped memory for tpu_custom_call.1']
    %9 = vsyncpa [#allocation3], 0
    %10 = vsyncpa [#allocation6], 0
    %11 = vsyncpa [#allocation4], 0
    %12 = vsyncpa [#allocation9], 0
    // Predicated region
    $region2: #{tpu_custom_call.1} parent=1 // pred_check
      _
    $region3: #{tpu_custom_call.1} parent=1 // pred_check_branch
      %14 = sbr.rel (0) target = $region5
    $region4: #{tpu_custom_call.1} parent=1 // pred_region
      %16 = vsyncadd [#allocation3], 0
      %s17 = sshll.u32 %s0, 4
      %s18 = int_to_ptr.hbm [resolvable:$true] %s17
      %s19 = sshll.u32 [#allocation2], 4
      %s20 = int_to_ptr.vmem [resolvable:$true] %s19
      %25 = dma.hbm_to_vmem [thread:$0]  %s18, 2048, %s20, [#allocation3], 64, 64, 4
    $region5: #{tpu_custom_call.1} parent=1 // pred_fallthru
      _
    // Predicated region
    $region6: #{tpu_custom_call.1} parent=1 // pred_check
      _
    $region7: #{tpu_custom_call.1} parent=1 // pred_check_branch
      %27 = sbr.rel (0) target = $region9
    $region8: #{tpu_custom_call.1} parent=1 // pred_region
      %29 = vsyncadd [#allocation6], 0
      %s30 = sshll.u32 %s1, 4
      %s31 = int_to_ptr.hbm [resolvable:$true] %s30
      %s32 = sshll.u32 [#allocation5], 4
      %s33 = int_to_ptr.vmem [resolvable:$true] %s32
      %38 = dma.hbm_to_vmem [thread:$0]  %s31, 2048, %s33, [#allocation6], 128, 128, 8
    $region9: #{tpu_custom_call.1} parent=1 // pred_fallthru
      _
    // Predicated region
    $region10: #{tpu_custom_call.1} parent=1 // pred_check
      _
    $region11: #{tpu_custom_call.1} parent=1 // pred_check_branch
      %40 = sbr.rel (0) target = $region13
    $region12: #{tpu_custom_call.1} parent=1 // pred_region
      %42 = dma.done [#allocation3], 2048
    $region13: #{tpu_custom_call.1} parent=1 // pred_fallthru
      _
    // Predicated region
    $region14: #{tpu_custom_call.1} parent=1 // pred_check
      _
    $region15: #{tpu_custom_call.1} parent=1 // pred_check_branch
      %44 = sbr.rel (0) target = $region17
    $region16: #{tpu_custom_call.1} parent=1 // pred_region
      %46 = dma.done [#allocation6], 2048
    $region17: #{tpu_custom_call.1} parent=1 // pred_fallthru
      _
    %v47 = vld [vmem:[#allocation2] sm:$0xf]
    %v48 = vld [vmem:[#allocation2 + $0x4] sm:$0xf]
    %v49 = vld [vmem:[#allocation2 + $0x8] sm:$0xf]
    %v50 = vld [vmem:[#allocation2 + $0xc] sm:$0xf]
    %v51 = vld [vmem:[#allocation2 + $0x10] sm:$0xf]
    %v52 = vld [vmem:[#allocation2 + $0x14] sm:$0xf]
    %v53 = vld [vmem:[#allocation2 + $0x18] sm:$0xf]
    %v54 = vld [vmem:[#allocation2 + $0x1c] sm:$0xf]
    %v55 = vld [vmem:[#allocation2 + $0x20] sm:$0xf]
    %v56 = vld [vmem:[#allocation2 + $0x24] sm:$0xf]
    %v57 = vld [vmem:[#allocation2 + $0x28] sm:$0xf]
    %v58 = vld [vmem:[#allocation2 + $0x2c] sm:$0xf]
    %v59 = vld [vmem:[#allocation2 + $0x30] sm:$0xf]
    %v60 = vld [vmem:[#allocation2 + $0x34] sm:$0xf]
    %v61 = vld [vmem:[#allocation2 + $0x38] sm:$0xf]
    %v62 = vld [vmem:[#allocation2 + $0x3c] sm:$0xf]
    %v63 = vld [vmem:[#allocation2 + $0x40] sm:$0xf]
    %v64 = vld [vmem:[#allocation2 + $0x44] sm:$0xf]
    %v65 = vld [vmem:[#allocation2 + $0x48] sm:$0xf]
    %v66 = vld [vmem:[#allocation2 + $0x4c] sm:$0xf]
    %v67 = vld [vmem:[#allocation2 + $0x50] sm:$0xf]
    %v68 = vld [vmem:[#allocation2 + $0x54] sm:$0xf]
    %v69 = vld [vmem:[#allocation2 + $0x58] sm:$0xf]
    %v70 = vld [vmem:[#allocation2 + $0x5c] sm:$0xf]
    %v71 = vld [vmem:[#allocation2 + $0x60] sm:$0xf]
    %v72 = vld [vmem:[#allocation2 + $0x64] sm:$0xf]
    %v73 = vld [vmem:[#allocation2 + $0x68] sm:$0xf]
    %v74 = vld [vmem:[#allocation2 + $0x6c] sm:$0xf]
    %v75 = vld [vmem:[#allocation2 + $0x70] sm:$0xf]
    %v76 = vld [vmem:[#allocation2 + $0x74] sm:$0xf]
    %v77 = vld [vmem:[#allocation2 + $0x78] sm:$0xf]
    %v78 = vld [vmem:[#allocation2 + $0x7c] sm:$0xf]
    %v79 = vld [vmem:[#allocation5] sm:$0xff]
    %v80 = vld [vmem:[#allocation5 + $0x8] sm:$0xff]
    %v81 = vld [vmem:[#allocation5 + $0x10] sm:$0xff]
    %v82 = vld [vmem:[#allocation5 + $0x18] sm:$0xff]
    %v83 = vld [vmem:[#allocation5 + $0x20] sm:$0xff]
    %v84 = vld [vmem:[#allocation5 + $0x28] sm:$0xff]
    %v85 = vld [vmem:[#allocation5 + $0x30] sm:$0xff]
    %v86 = vld [vmem:[#allocation5 + $0x38] sm:$0xff]
    %v87 = vld [vmem:[#allocation5 + $0x40] sm:$0xff]
    %v88 = vld [vmem:[#allocation5 + $0x48] sm:$0xff]
    %v89 = vld [vmem:[#allocation5 + $0x50] sm:$0xff]
    %v90 = vld [vmem:[#allocation5 + $0x58] sm:$0xff]
    %v91 = vld [vmem:[#allocation5 + $0x60] sm:$0xff]
    %v92 = vld [vmem:[#allocation5 + $0x68] sm:$0xff]
    %v93 = vld [vmem:[#allocation5 + $0x70] sm:$0xff]
    %v94 = vld [vmem:[#allocation5 + $0x78] sm:$0xff]
    %v127 = vunpack.c.l.b16 %v47
    %v128 = vunpack.c.l.b16 %v48
    %v129 = vunpack.c.l.b16 %v49
    %v130 = vunpack.c.l.b16 %v50
    %v131 = vunpack.c.l.b16 %v51
    %v132 = vunpack.c.l.b16 %v52
    %v133 = vunpack.c.l.b16 %v53
    %v134 = vunpack.c.l.b16 %v54
    %v135 = vunpack.c.l.b16 %v55
    %v136 = vunpack.c.l.b16 %v56
    %v137 = vunpack.c.l.b16 %v57
    %v138 = vunpack.c.l.b16 %v58
    %v139 = vunpack.c.l.b16 %v59
    %v140 = vunpack.c.l.b16 %v60
    %v141 = vunpack.c.l.b16 %v61
    %v142 = vunpack.c.l.b16 %v62
    %v143 = vunpack.c.l.b16 %v63
    %v144 = vunpack.c.l.b16 %v64
    %v145 = vunpack.c.l.b16 %v65
    %v146 = vunpack.c.l.b16 %v66
    %v147 = vunpack.c.l.b16 %v67
    %v148 = vunpack.c.l.b16 %v68
    %v149 = vunpack.c.l.b16 %v69
    %v150 = vunpack.c.l.b16 %v70
    %v151 = vunpack.c.l.b16 %v71
    %v152 = vunpack.c.l.b16 %v72
    %v153 = vunpack.c.l.b16 %v73
    %v154 = vunpack.c.l.b16 %v74
    %v155 = vunpack.c.l.b16 %v75
    %v156 = vunpack.c.l.b16 %v76
    %v157 = vunpack.c.l.b16 %v77
    %v158 = vunpack.c.l.b16 %v78
    %v159 = vpack.c.b16 %v128, %v127
    %v160 = vpack.c.b16 %v130, %v129
    %v161 = vpack.c.b16 %v132, %v131
    %v162 = vpack.c.b16 %v134, %v133
    %v163 = vpack.c.b16 %v136, %v135
    %v164 = vpack.c.b16 %v138, %v137
    %v165 = vpack.c.b16 %v140, %v139
    %v166 = vpack.c.b16 %v142, %v141
    %v167 = vpack.c.b16 %v144, %v143
    %v168 = vpack.c.b16 %v146, %v145
    %v169 = vpack.c.b16 %v148, %v147
    %v170 = vpack.c.b16 %v150, %v149
    %v171 = vpack.c.b16 %v152, %v151
    %v172 = vpack.c.b16 %v154, %v153
    %v173 = vpack.c.b16 %v156, %v155
    %v174 = vpack.c.b16 %v158, %v157
    %v207 = vunpack.c.l.b16 %v79
    %v208 = vunpack.c.h.b16 %v79
    %v209 = vunpack.c.l.b16 %v80
    %v210 = vunpack.c.h.b16 %v80
    %v211 = vunpack.c.l.b16 %v81
    %v212 = vunpack.c.h.b16 %v81
    %v213 = vunpack.c.l.b16 %v82
    %v214 = vunpack.c.h.b16 %v82
    %v215 = vunpack.c.l.b16 %v83
    %v216 = vunpack.c.h.b16 %v83
    %v217 = vunpack.c.l.b16 %v84
    %v218 = vunpack.c.h.b16 %v84
    %v219 = vunpack.c.l.b16 %v85
    %v220 = vunpack.c.h.b16 %v85
    %v221 = vunpack.c.l.b16 %v86
    %v222 = vunpack.c.h.b16 %v86
    %v223 = vunpack.c.l.b16 %v87
    %v224 = vunpack.c.h.b16 %v87
    %v225 = vunpack.c.l.b16 %v88
    %v226 = vunpack.c.h.b16 %v88
    %v227 = vunpack.c.l.b16 %v89
    %v228 = vunpack.c.h.b16 %v89
    %v229 = vunpack.c.l.b16 %v90
    %v230 = vunpack.c.h.b16 %v90
    %v231 = vunpack.c.l.b16 %v91
    %v232 = vunpack.c.h.b16 %v91
    %v233 = vunpack.c.l.b16 %v92
    %v234 = vunpack.c.h.b16 %v92
    %v235 = vunpack.c.l.b16 %v93
    %v236 = vunpack.c.h.b16 %v93
    %v237 = vunpack.c.l.b16 %v94
    %v238 = vunpack.c.h.b16 %v94
    %v239 = vpack.c.b16 %v209, %v207
    %v240 = vpack.c.b16 %v210, %v208
    %v241 = vpack.c.b16 %v213, %v211
    %v242 = vpack.c.b16 %v214, %v212
    %v243 = vpack.c.b16 %v217, %v215
    %v244 = vpack.c.b16 %v218, %v216
    %v245 = vpack.c.b16 %v221, %v219
    %v246 = vpack.c.b16 %v222, %v220
    %v247 = vpack.c.b16 %v225, %v223
    %v248 = vpack.c.b16 %v226, %v224
    %v249 = vpack.c.b16 %v229, %v227
    %v250 = vpack.c.b16 %v230, %v228
    %v251 = vpack.c.b16 %v233, %v231
    %v252 = vpack.c.b16 %v234, %v232
    %v253 = vpack.c.b16 %v237, %v235
    %v254 = vpack.c.b16 %v238, %v236
    %271 = vmatpush.bf16.msra.mxu0 %v253
    %272 = vmatpush.bf16.msra.mxu0 %v251
    %273 = vmatpush.bf16.msra.mxu0 %v249
    %274 = vmatpush.bf16.msra.mxu0 %v247
    %275 = vmatpush.bf16.msra.mxu0 %v245
    %276 = vmatpush.bf16.msra.mxu0 %v243
    %277 = vmatpush.bf16.msra.mxu0 %v241
    %278 = vmatpush.bf16.msra.mxu0 %v239
    %279 = vmatmul.bf16.gmra.mxu0 %v159
    %v280 = vpop.f32.mrf.mxu0
    %v281 = vadd.f32 0.0, %v280
    %v282 = vpop.f32.mrf.mxu0
    %v283 = vadd.f32 0.0, %v282
    %284 = vmatmul.bf16.gmra.mxu0 %v160
    %v285 = vpop.f32.mrf.mxu0
    %v286 = vadd.f32 0.0, %v285
    %v287 = vpop.f32.mrf.mxu0
    %v288 = vadd.f32 0.0, %v287
    %289 = vmatmul.bf16.gmra.mxu0 %v161
    %v290 = vpop.f32.mrf.mxu0
    %v291 = vadd.f32 0.0, %v290
    %v292 = vpop.f32.mrf.mxu0
    %v293 = vadd.f32 0.0, %v292
    %294 = vmatmul.bf16.gmra.mxu0 %v162
    %v295 = vpop.f32.mrf.mxu0
    %v296 = vadd.f32 0.0, %v295
    %v297 = vpop.f32.mrf.mxu0
    %v298 = vadd.f32 0.0, %v297
    %299 = vmatmul.bf16.gmra.mxu0 %v163
    %v300 = vpop.f32.mrf.mxu0
    %v301 = vadd.f32 0.0, %v300
    %v302 = vpop.f32.mrf.mxu0
    %v303 = vadd.f32 0.0, %v302
    %304 = vmatmul.bf16.gmra.mxu0 %v164
    %v305 = vpop.f32.mrf.mxu0
    %v306 = vadd.f32 0.0, %v305
    %v307 = vpop.f32.mrf.mxu0
    %v308 = vadd.f32 0.0, %v307
    %309 = vmatmul.bf16.gmra.mxu0 %v165
    %v310 = vpop.f32.mrf.mxu0
    %v311 = vadd.f32 0.0, %v310
    %v312 = vpop.f32.mrf.mxu0
    %v313 = vadd.f32 0.0, %v312
    %314 = vmatmul.bf16.gmra.mxu0 %v166
    %v315 = vpop.f32.mrf.mxu0
    %v316 = vadd.f32 0.0, %v315
    %v317 = vpop.f32.mrf.mxu0
    %v318 = vadd.f32 0.0, %v317
    %319 = vmatmul.bf16.gmra.mxu0 %v167
    %v320 = vpop.f32.mrf.mxu0
    %v321 = vadd.f32 0.0, %v320
    %v322 = vpop.f32.mrf.mxu0
    %v323 = vadd.f32 0.0, %v322
    %324 = vmatmul.bf16.gmra.mxu0 %v168
    %v325 = vpop.f32.mrf.mxu0
    %v326 = vadd.f32 0.0, %v325
    %v327 = vpop.f32.mrf.mxu0
    %v328 = vadd.f32 0.0, %v327
    %329 = vmatmul.bf16.gmra.mxu0 %v169
    %v330 = vpop.f32.mrf.mxu0
    %v331 = vadd.f32 0.0, %v330
    %v332 = vpop.f32.mrf.mxu0
    %v333 = vadd.f32 0.0, %v332
    %334 = vmatmul.bf16.gmra.mxu0 %v170
    %v335 = vpop.f32.mrf.mxu0
    %v336 = vadd.f32 0.0, %v335
    %v337 = vpop.f32.mrf.mxu0
    %v338 = vadd.f32 0.0, %v337
    %339 = vmatmul.bf16.gmra.mxu0 %v171
    %v340 = vpop.f32.mrf.mxu0
    %v341 = vadd.f32 0.0, %v340
    %v342 = vpop.f32.mrf.mxu0
    %v343 = vadd.f32 0.0, %v342
    %344 = vmatmul.bf16.gmra.mxu0 %v172
    %v345 = vpop.f32.mrf.mxu0
    %v346 = vadd.f32 0.0, %v345
    %v347 = vpop.f32.mrf.mxu0
    %v348 = vadd.f32 0.0, %v347
    %349 = vmatmul.bf16.gmra.mxu0 %v173
    %v350 = vpop.f32.mrf.mxu0
    %v351 = vadd.f32 0.0, %v350
    %v352 = vpop.f32.mrf.mxu0
    %v353 = vadd.f32 0.0, %v352
    %354 = vmatmul.bf16.gmra.mxu0 %v174
    %v355 = vpop.f32.mrf.mxu0
    %v356 = vadd.f32 0.0, %v355
    %v357 = vpop.f32.mrf.mxu0
    %v358 = vadd.f32 0.0, %v357
    %359 = vdwg.mxu0
    %360 = vmatpush.bf16.msra.mxu0 %v254
    %361 = vmatpush.bf16.msra.mxu0 %v252
    %362 = vmatpush.bf16.msra.mxu0 %v250
    %363 = vmatpush.bf16.msra.mxu0 %v248
    %364 = vmatpush.bf16.msra.mxu0 %v246
    %365 = vmatpush.bf16.msra.mxu0 %v244
    %366 = vmatpush.bf16.msra.mxu0 %v242
    %367 = vmatpush.bf16.msra.mxu0 %v240
    %368 = vmatmul.bf16.gmra.mxu0 %v159
    %v369 = vpop.f32.mrf.mxu0
    %v370 = vadd.f32 0.0, %v369
    %v371 = vpop.f32.mrf.mxu0
    %v372 = vadd.f32 0.0, %v371
    %373 = vmatmul.bf16.gmra.mxu0 %v160
    %v374 = vpop.f32.mrf.mxu0
    %v375 = vadd.f32 0.0, %v374
    %v376 = vpop.f32.mrf.mxu0
    %v377 = vadd.f32 0.0, %v376
    %378 = vmatmul.bf16.gmra.mxu0 %v161
    %v379 = vpop.f32.mrf.mxu0
    %v380 = vadd.f32 0.0, %v379
    %v381 = vpop.f32.mrf.mxu0
    %v382 = vadd.f32 0.0, %v381
    %383 = vmatmul.bf16.gmra.mxu0 %v162
    %v384 = vpop.f32.mrf.mxu0
    %v385 = vadd.f32 0.0, %v384
    %v386 = vpop.f32.mrf.mxu0
    %v387 = vadd.f32 0.0, %v386
    %388 = vmatmul.bf16.gmra.mxu0 %v163
    %v389 = vpop.f32.mrf.mxu0
    %v390 = vadd.f32 0.0, %v389
    %v391 = vpop.f32.mrf.mxu0
    %v392 = vadd.f32 0.0, %v391
    %393 = vmatmul.bf16.gmra.mxu0 %v164
    %v394 = vpop.f32.mrf.mxu0
    %v395 = vadd.f32 0.0, %v394
    %v396 = vpop.f32.mrf.mxu0
    %v397 = vadd.f32 0.0, %v396
    %398 = vmatmul.bf16.gmra.mxu0 %v165
    %v399 = vpop.f32.mrf.mxu0
    %v400 = vadd.f32 0.0, %v399
    %v401 = vpop.f32.mrf.mxu0
    %v402 = vadd.f32 0.0, %v401
    %403 = vmatmul.bf16.gmra.mxu0 %v166
    %v404 = vpop.f32.mrf.mxu0
    %v405 = vadd.f32 0.0, %v404
    %v406 = vpop.f32.mrf.mxu0
    %v407 = vadd.f32 0.0, %v406
    %408 = vmatmul.bf16.gmra.mxu0 %v167
    %v409 = vpop.f32.mrf.mxu0
    %v410 = vadd.f32 0.0, %v409
    %v411 = vpop.f32.mrf.mxu0
    %v412 = vadd.f32 0.0, %v411
    %413 = vmatmul.bf16.gmra.mxu0 %v168
    %v414 = vpop.f32.mrf.mxu0
    %v415 = vadd.f32 0.0, %v414
    %v416 = vpop.f32.mrf.mxu0
    %v417 = vadd.f32 0.0, %v416
    %418 = vmatmul.bf16.gmra.mxu0 %v169
    %v419 = vpop.f32.mrf.mxu0
    %v420 = vadd.f32 0.0, %v419
    %v421 = vpop.f32.mrf.mxu0
    %v422 = vadd.f32 0.0, %v421
    %423 = vmatmul.bf16.gmra.mxu0 %v170
    %v424 = vpop.f32.mrf.mxu0
    %v425 = vadd.f32 0.0, %v424
    %v426 = vpop.f32.mrf.mxu0
    %v427 = vadd.f32 0.0, %v426
    %428 = vmatmul.bf16.gmra.mxu0 %v171
    %v429 = vpop.f32.mrf.mxu0
    %v430 = vadd.f32 0.0, %v429
    %v431 = vpop.f32.mrf.mxu0
    %v432 = vadd.f32 0.0, %v431
    %433 = vmatmul.bf16.gmra.mxu0 %v172
    %v434 = vpop.f32.mrf.mxu0
    %v435 = vadd.f32 0.0, %v434
    %v436 = vpop.f32.mrf.mxu0
    %v437 = vadd.f32 0.0, %v436
    %438 = vmatmul.bf16.gmra.mxu0 %v173
    %v439 = vpop.f32.mrf.mxu0
    %v440 = vadd.f32 0.0, %v439
    %v441 = vpop.f32.mrf.mxu0
    %v442 = vadd.f32 0.0, %v441
    %443 = vmatmul.bf16.gmra.mxu0 %v174
    %v444 = vpop.f32.mrf.mxu0
    %v445 = vadd.f32 0.0, %v444
    %v446 = vpop.f32.mrf.mxu0
    %v447 = vadd.f32 0.0, %v446
    %448 = vdwg.mxu0
    %v449 = vpack.c.bf16 %v281, %v281
    %v450 = vpack.c.bf16 %v283, %v283
    %v451 = vpack.c.bf16 %v286, %v286
    %v452 = vpack.c.bf16 %v288, %v288
    %v453 = vpack.c.bf16 %v291, %v291
    %v454 = vpack.c.bf16 %v293, %v293
    %v455 = vpack.c.bf16 %v296, %v296
    %v456 = vpack.c.bf16 %v298, %v298
    %v457 = vpack.c.bf16 %v301, %v301
    %v458 = vpack.c.bf16 %v303, %v303
    %v459 = vpack.c.bf16 %v306, %v306
    %v460 = vpack.c.bf16 %v308, %v308
    %v461 = vpack.c.bf16 %v311, %v311
    %v462 = vpack.c.bf16 %v313, %v313
    %v463 = vpack.c.bf16 %v316, %v316
    %v464 = vpack.c.bf16 %v318, %v318
    %v465 = vpack.c.bf16 %v321, %v321
    %v466 = vpack.c.bf16 %v323, %v323
    %v467 = vpack.c.bf16 %v326, %v326
    %v468 = vpack.c.bf16 %v328, %v328
    %v469 = vpack.c.bf16 %v331, %v331
    %v470 = vpack.c.bf16 %v333, %v333
    %v471 = vpack.c.bf16 %v336, %v336
    %v472 = vpack.c.bf16 %v338, %v338
    %v473 = vpack.c.bf16 %v341, %v341
    %v474 = vpack.c.bf16 %v343, %v343
    %v475 = vpack.c.bf16 %v346, %v346
    %v476 = vpack.c.bf16 %v348, %v348
    %v477 = vpack.c.bf16 %v351, %v351
    %v478 = vpack.c.bf16 %v353, %v353
    %v479 = vpack.c.bf16 %v356, %v356
    %v480 = vpack.c.bf16 %v358, %v358
    %481 = vst [vmem:[#allocation7] sm:$0xf] %v449
    %482 = vst [vmem:[#allocation7 + $0x4] sm:$0xf] %v450
    %483 = vst [vmem:[#allocation7 + $0x8] sm:$0xf] %v451
    %484 = vst [vmem:[#allocation7 + $0xc] sm:$0xf] %v452
    %485 = vst [vmem:[#allocation7 + $0x10] sm:$0xf] %v453
    %486 = vst [vmem:[#allocation7 + $0x14] sm:$0xf] %v454
    %487 = vst [vmem:[#allocation7 + $0x18] sm:$0xf] %v455
    %488 = vst [vmem:[#allocation7 + $0x1c] sm:$0xf] %v456
    %489 = vst [vmem:[#allocation7 + $0x20] sm:$0xf] %v457
    %490 = vst [vmem:[#allocation7 + $0x24] sm:$0xf] %v458
    %491 = vst [vmem:[#allocation7 + $0x28] sm:$0xf] %v459
    %492 = vst [vmem:[#allocation7 + $0x2c] sm:$0xf] %v460
    %493 = vst [vmem:[#allocation7 + $0x30] sm:$0xf] %v461
    %494 = vst [vmem:[#allocation7 + $0x34] sm:$0xf] %v462
    %495 = vst [vmem:[#allocation7 + $0x38] sm:$0xf] %v463
    %496 = vst [vmem:[#allocation7 + $0x3c] sm:$0xf] %v464
    %497 = vst [vmem:[#allocation7 + $0x40] sm:$0xf] %v465
    %498 = vst [vmem:[#allocation7 + $0x44] sm:$0xf] %v466
    %499 = vst [vmem:[#allocation7 + $0x48] sm:$0xf] %v467
    %500 = vst [vmem:[#allocation7 + $0x4c] sm:$0xf] %v468
    %501 = vst [vmem:[#allocation7 + $0x50] sm:$0xf] %v469
    %502 = vst [vmem:[#allocation7 + $0x54] sm:$0xf] %v470
    %503 = vst [vmem:[#allocation7 + $0x58] sm:$0xf] %v471
    %504 = vst [vmem:[#allocation7 + $0x5c] sm:$0xf] %v472
    %505 = vst [vmem:[#allocation7 + $0x60] sm:$0xf] %v473
    %506 = vst [vmem:[#allocation7 + $0x64] sm:$0xf] %v474
    %507 = vst [vmem:[#allocation7 + $0x68] sm:$0xf] %v475
    %508 = vst [vmem:[#allocation7 + $0x6c] sm:$0xf] %v476
    %509 = vst [vmem:[#allocation7 + $0x70] sm:$0xf] %v477
    %510 = vst [vmem:[#allocation7 + $0x74] sm:$0xf] %v478
    %511 = vst [vmem:[#allocation7 + $0x78] sm:$0xf] %v479
    %512 = vst [vmem:[#allocation7 + $0x7c] sm:$0xf] %v480
    %513 = vst [vmem:[#allocation8] sm:$0xff] %v370
    %514 = vst [vmem:[#allocation8 + $0x8] sm:$0xff] %v372
    %515 = vst [vmem:[#allocation8 + $0x10] sm:$0xff] %v375
    %516 = vst [vmem:[#allocation8 + $0x18] sm:$0xff] %v377
    %517 = vst [vmem:[#allocation8 + $0x20] sm:$0xff] %v380
    %518 = vst [vmem:[#allocation8 + $0x28] sm:$0xff] %v382
    %519 = vst [vmem:[#allocation8 + $0x30] sm:$0xff] %v385
    %520 = vst [vmem:[#allocation8 + $0x38] sm:$0xff] %v387
    %521 = vst [vmem:[#allocation8 + $0x40] sm:$0xff] %v390
    %522 = vst [vmem:[#allocation8 + $0x48] sm:$0xff] %v392
    %523 = vst [vmem:[#allocation8 + $0x50] sm:$0xff] %v395
    %524 = vst [vmem:[#allocation8 + $0x58] sm:$0xff] %v397
    %525 = vst [vmem:[#allocation8 + $0x60] sm:$0xff] %v400
    %526 = vst [vmem:[#allocation8 + $0x68] sm:$0xff] %v402
    %527 = vst [vmem:[#allocation8 + $0x70] sm:$0xff] %v405
    %528 = vst [vmem:[#allocation8 + $0x78] sm:$0xff] %v407
    %529 = vst [vmem:[#allocation8 + $0x80] sm:$0xff] %v410
    %530 = vst [vmem:[#allocation8 + $0x88] sm:$0xff] %v412
    %531 = vst [vmem:[#allocation8 + $0x90] sm:$0xff] %v415
    %532 = vst [vmem:[#allocation8 + $0x98] sm:$0xff] %v417
    %533 = vst [vmem:[#allocation8 + $0xa0] sm:$0xff] %v420
    %534 = vst [vmem:[#allocation8 + $0xa8] sm:$0xff] %v422
    %535 = vst [vmem:[#allocation8 + $0xb0] sm:$0xff] %v425
    %536 = vst [vmem:[#allocation8 + $0xb8] sm:$0xff] %v427
    %537 = vst [vmem:[#allocation8 + $0xc0] sm:$0xff] %v430
    %538 = vst [vmem:[#allocation8 + $0xc8] sm:$0xff] %v432
    %539 = vst [vmem:[#allocation8 + $0xd0] sm:$0xff] %v435
    %540 = vst [vmem:[#allocation8 + $0xd8] sm:$0xff] %v437
    %541 = vst [vmem:[#allocation8 + $0xe0] sm:$0xff] %v440
    %542 = vst [vmem:[#allocation8 + $0xe8] sm:$0xff] %v442
    %543 = vst [vmem:[#allocation8 + $0xf0] sm:$0xff] %v445
    %544 = vst [vmem:[#allocation8 + $0xf8] sm:$0xff] %v447
    // Predicated region
    $region18: #{tpu_custom_call.1} parent=1 // pred_check
      _
    $region19: #{tpu_custom_call.1} parent=1 // pred_check_branch
      %546 = sbr.rel (0) target = $region21
    $region20: #{tpu_custom_call.1} parent=1 // pred_region
      %548 = vsyncadd [#allocation4], 0
      %s549 = sshll.u32 [#allocation7], 4
      %s550 = int_to_ptr.vmem [resolvable:$true] %s549
      %s551 = sshll.u32 %s2, 4
      %s552 = int_to_ptr.hbm [resolvable:$true] %s551
      %557 = dma.vmem_to_hbm [thread:$0]  %s550, 2048, %s552, [#allocation4], 64, 64, 4
    $region21: #{tpu_custom_call.1} parent=1 // pred_fallthru
      _
    // Predicated region
    $region22: #{tpu_custom_call.1} parent=1 // pred_check
      _
    $region23: #{tpu_custom_call.1} parent=1 // pred_check_branch
      %559 = sbr.rel (0) target = $region25
    $region24: #{tpu_custom_call.1} parent=1 // pred_region
      %561 = vsyncadd [#allocation9], 0
      %s562 = sshll.u32 [#allocation8], 4
      %s563 = int_to_ptr.vmem [resolvable:$true] %s562
      %s564 = sshll.u32 %s3, 4
      %s565 = int_to_ptr.hbm [resolvable:$true] %s564
      %570 = dma.vmem_to_hbm [thread:$0]  %s563, 4096, %s565, [#allocation9], 128, 128, 8
    $region25: #{tpu_custom_call.1} parent=1 // pred_fallthru
      _
    // Predicated region
    $region26: #{tpu_custom_call.1} parent=1 // pred_check
      _
    $region27: #{tpu_custom_call.1} parent=1 // pred_check_branch
      %572 = sbr.rel (0) target = $region29
    $region28: #{tpu_custom_call.1} parent=1 // pred_region
      %574 = dma.done [#allocation4], 2048
    $region29: #{tpu_custom_call.1} parent=1 // pred_fallthru
      _
    // Predicated region
    $region30: #{tpu_custom_call.1} parent=1 // pred_check
      _
    $region31: #{tpu_custom_call.1} parent=1 // pred_check_branch
      %576 = sbr.rel (0) target = $region33
    $region32: #{tpu_custom_call.1} parent=1 // pred_region
      %578 = dma.done [#allocation9], 4096
    $region33: #{tpu_custom_call.1} parent=1 // pred_fallthru
      _
    %579 = vsyncpa [#allocation3], 1
    %580 = vsyncpa [#allocation6], 1
    %581 = vsyncpa [#allocation4], 1
    %582 = vsyncpa [#allocation9], 1

</llo_original>
